<compile_context>
chip_gen: v6e
topology: v6e:2x2x1
jax: 0.10.0
libtpu: 0.0.40
codegen_flags: <defaults>
</compile_context>

<pallas_src>
import jax
import jax.numpy as jnp
from jax import lax
from jax.experimental import pallas as pl
from jax.experimental.pallas import tpu as pltpu


def _round_up(x: int, m: int) -> int:
    return ((x + m - 1) // m) * m


def fm_kernel(x_ref, rt_ref, v2_ref, sq_ref, sl_ref, b_ref, o_ref):
    # x_ref : (TB, fm_in)        activation tile (streamed, double-buffered)
    # rt_ref: (fm_k_pad, fm_in)  [sqrt(0.5)*V | w | 0-pad]^T, VMEM-resident
    # v2_ref: (1, fm_in)         0.5 * rowsum(V*V), VMEM-resident
    # sq_ref: (1, fm_k_pad)      1.0 on the V rows of rt, else 0 (k-sum selector)
    # sl_ref: (1, fm_k_pad)      1.0 on the w row of rt, else 0  (linear selector)
    # b_ref : (1,) in SMEM       linear bias
    # o_ref : (1, 1, TB)         lane-dense output row for this batch tile
    x = x_ref[...]

    # One fused MXU pass; minor-minor contraction puts batch on the lane axis so
    # every per-row epilogue result is a lane-dense (1, TB) row.
    y = lax.dot_general(rt_ref[...], x, (((1,), (1,)), ((), ())),
                        preferred_element_type=jnp.float32)           # (fm_k_pad, TB)

    # 0.5 * sum_k (x@V)_k^2 -- the 0.5 was folded into rt via the sqrt(0.5)
    # scaling; padding/linear rows are masked by the selector, so no sublane
    # slicing of y is ever needed (no relayout copies).
    s1 = jnp.dot(sq_ref[...], y * y, preferred_element_type=jnp.float32)   # (1, TB)
    # Linear term x @ w picked out of the fused result with a selector matvec.
    lin = jnp.dot(sl_ref[...], y, preferred_element_type=jnp.float32)      # (1, TB)
    # 0.5 * sum_k (x^2 @ V^2)_k == (x^2) @ (0.5*rowsum(V^2)): VPU square + matvec.
    s2 = lax.dot_general(v2_ref[...], x * x, (((1,), (1,)), ((), ())),
                         preferred_element_type=jnp.float32)               # (1, TB)

    o_ref[0] = (s1 - s2 + lin + b_ref[0]).astype(o_ref.dtype)


def _vmem_budget():
    """Per-generation (target_tb, vmem_limit_bytes)."""
    try:
        cap = int(getattr(pltpu.get_tpu_info(), "vmem_capacity_bytes",
                          128 * 1024 * 1024))
    except Exception:
        cap = 128 * 1024 * 1024  # assume v5e/v6e-class if the query fails
    if cap <= 64 * 1024 * 1024:
        # v7x-class: 64 MiB physical per TC.  48 MiB limit keeps headroom and
        # still admits tb up to ~24K after the 4x lane-padding of the x tile.
        return 16384, 48 * 1024 * 1024
    # v5e / v6e: 128 MiB physical.  v6e (1.35 TB/s) wants 16K-32K rows/step to
    # push the fixed per-step cost to ~10%; on v5e (0.82 TB/s) 8K already
    # suffices and 16K merely costs a little extra VMEM under a 64 MiB limit.
    return 16384, 64 * 1024 * 1024


def fm_layer(x, V, lin_w, lin_b, *, tb=None):
    """x: (B, fm_in), V: (fm_in, fm_k), lin_w: (1, fm_in), lin_b: (1,) -> (B, 1)."""
    B, fm_in = x.shape
    fm_k = V.shape[1]
    fm_k_pad = _round_up(fm_k + 1, 8)  # rt rows padded to a sublane multiple

    # ---- weight-side prep (parameter-only; done once) ------------------------
    sqrt_half = jnp.sqrt(jnp.float32(0.5))
    rt = jnp.concatenate(
        [(V.astype(jnp.float32) * sqrt_half).T,            # (fm_k, fm_in)
         lin_w.reshape(1, fm_in).astype(jnp.float32)],     # (1, fm_in)
        axis=0)
    rt = jnp.pad(rt, ((0, fm_k_pad - (fm_k + 1)), (0, 0)))            # (fm_k_pad, fm_in)
    v2 = 0.5 * jnp.sum(jnp.square(V.astype(jnp.float32)), axis=1)[None, :]  # (1, fm_in)
    ridx = jnp.arange(fm_k_pad)
    sel_sq = (ridx < fm_k).astype(jnp.float32)[None, :]                # (1, fm_k_pad)
    sel_lin = (ridx == fm_k).astype(jnp.float32)[None, :]              # (1, fm_k_pad)
    b = lin_b.reshape(1).astype(jnp.float32)

    # ---- batch-tile selection (VMEM-aware, multiple of 128) -------------------
    target_tb, vmem_limit = _vmem_budget()
    # Per-row VMEM cost of the pipelined blocks:
    #   x tile: fm_in lane-pads to 128 -> 512 B/row, double-buffered;
    #   out (1,1,tb): sublane-pads 1 -> 8 rows -> 32 B/row, double-buffered.
    bytes_per_row = 2 * _round_up(fm_in, 128) * 4 + 2 * 8 * 4
    tb_cap = max(128, (int(vmem_limit * 0.75) // bytes_per_row) // 128 * 128)

    if tb is None:
        tb = target_tb
    tb = min(tb, tb_cap)
    tb = min(tb, _round_up(B, 128))           # never tile past the padded batch
    if B > 128:
        # Keep >= 2 grid steps so ("parallel",) can shard the batch across both
        # TensorCores on v7x (harmless on single-TC v5e/v6e).
        tb = min(tb, _round_up(pl.cdiv(B, 2), 128))
    tb = max(128, tb)                          # always a multiple of 128

    grid = pl.cdiv(B, tb)
    b_pad = grid * tb
    if b_pad != B:
        x = jnp.pad(x, ((0, b_pad - B), (0, 0)))   # padded rows are dropped below

    # TODO(synk): if x already arrives in bf16 from the previous layer, stream it
    # as bf16 (halves HBM traffic; keep f32 accumulation); and on v7x with
    # fm_in << 128, the block-diagonal (B/4, 128) packing of x removes the 4x
    # lane-padding and raises the tb ceiling past the 64 MiB VMEM wall.
    out = pl.pallas_call(
        fm_kernel,
        out_shape=jax.ShapeDtypeStruct((grid, 1, tb), jnp.float32),
        grid_spec=pltpu.PrefetchScalarGridSpec(
            num_scalar_prefetch=0,
            grid=(grid,),
            in_specs=[
                pl.BlockSpec((tb, fm_in), lambda i: (i, 0)),          # x (streams)
                pl.BlockSpec((fm_k_pad, fm_in), lambda i: (0, 0)),    # rt (resident)
                pl.BlockSpec((1, fm_in), lambda i: (0, 0)),           # 0.5*rowsum(V^2)
                pl.BlockSpec((1, fm_k_pad), lambda i: (0, 0)),        # k-sum selector
                pl.BlockSpec((1, fm_k_pad), lambda i: (0, 0)),        # linear selector
                pl.BlockSpec(memory_space=pltpu.SMEM),                # bias scalar
            ],
            out_specs=pl.BlockSpec((1, 1, tb), lambda i: (i, 0, 0)),  # lane-dense rows
        ),
        compiler_params=pltpu.CompilerParams(
            dimension_semantics=("parallel",),
            vmem_limit_bytes=vmem_limit,
        ),
    )(x, rt, v2, sel_sq, sel_lin, b)

    # (grid, 1, tb) row-major is exactly batch order; drop padding, restore (B, 1).
    return out.reshape(b_pad)[:B, None]


def fm_layer_ref(x, V, lin_w, lin_b):
    """Pure-JAX reference matching the PyTorch forward exactly."""
    s1_square = jnp.sum(jnp.square(x @ V), axis=1, keepdims=True)
    s2 = jnp.sum(jnp.square(x) @ jnp.square(V), axis=1, keepdims=True)
    return 0.5 * (s1_square - s2) + x @ lin_w.T + lin_b


if __name__ == "__main__":
    key = jax.random.PRNGKey(0)

    def run_case(B, fm_in, fm_k, case_key):
        kx, kv, kw, kb = jax.random.split(case_key, 4)
        x = jax.random.normal(kx, (B, fm_in), dtype=jnp.float32)
        V = jax.random.normal(kv, (fm_in, fm_k), dtype=jnp.float32)
        lin_w = jax.random.normal(kw, (1, fm_in), dtype=jnp.float32) / jnp.sqrt(
            jnp.float32(fm_in))
        lin_b = jax.random.normal(kb, (1,), dtype=jnp.float32) / jnp.sqrt(
            jnp.float32(fm_in))

        out = jax.block_until_ready(fm_layer(x, V, lin_w, lin_b))
        ref = fm_layer_ref(x, V, lin_w, lin_b)
        assert out.shape == (B, 1), out.shape
        err = float(jnp.max(jnp.abs(out - ref)))
        assert jnp.allclose(out, ref, atol=1e-3, rtol=1e-3), err

    k1, k2 = jax.random.split(key)
    run_case(256, 32, 16, k1)   # aligned batch / aligned fm_k
    run_case(200, 32, 10, k2)   # ragged batch + non-sublane-aligned fm_k

    print("KERNEL_OK")
</pallas_src>

<mosaic_0001>
module attributes {stable_mosaic.version = 11 : i64} {
  func.func @fm_kernel(%arg0: i32, %arg1: memref<128x32xf32, #tpu.memory_space<vmem>>, %arg2: memref<24x32xf32, #tpu.memory_space<vmem>>, %arg3: memref<1x32xf32, #tpu.memory_space<vmem>>, %arg4: memref<1x24xf32, #tpu.memory_space<vmem>>, %arg5: memref<1x24xf32, #tpu.memory_space<vmem>>, %arg6: memref<1xf32, #tpu.memory_space<smem>>, %arg7: memref<1x1x128xf32, #tpu.memory_space<vmem>>) attributes {dimension_semantics = [#tpu.dimension_semantics<parallel>], iteration_bounds = array<i64: 2>, scalar_prefetch = 0 : i64, scratch_operands = 0 : i64, tpu.core_type = #tpu.core_type<tc>, window_params = [{transform_indices = @transform_0, window_bounds = array<i64: 128, 32>}, {pipeline_mode = #tpu.pipeline_mode<synchronous>, transform_indices = @transform_1, window_bounds = array<i64: 24, 32>}, {pipeline_mode = #tpu.pipeline_mode<synchronous>, transform_indices = @transform_2, window_bounds = array<i64: 1, 32>}, {pipeline_mode = #tpu.pipeline_mode<synchronous>, transform_indices = @transform_3, window_bounds = array<i64: 1, 24>}, {pipeline_mode = #tpu.pipeline_mode<synchronous>, transform_indices = @transform_4, window_bounds = array<i64: 1, 24>}, {transform_indices = @transform_5, window_bounds = array<i64: 1>}, {transform_indices = @transform_6, window_bounds = array<i64: 1, 1, 128>}]} {
    %c0 = arith.constant 0 : index
    %c0_0 = arith.constant 0 : index
    %0 = vector.load %arg1[%c0, %c0_0] : memref<128x32xf32, #tpu.memory_space<vmem>>, vector<128x32xf32>
    %c0_1 = arith.constant 0 : index
    %c0_2 = arith.constant 0 : index
    %1 = vector.load %arg2[%c0_1, %c0_2] : memref<24x32xf32, #tpu.memory_space<vmem>>, vector<24x32xf32>
    %cst = arith.constant dense<0.000000e+00> : vector<24x128xf32>
    %2 = tpu.matmul %1, %0, %cst {dimension_numbers = #tpu.dot_dimension_numbers<[1], [1], [0], [0], [0, 0, 1, 0], [], []>} : vector<24x32xf32>, vector<128x32xf32>, vector<24x128xf32> -> vector<24x128xf32>
    %c0_3 = arith.constant 0 : index
    %c0_4 = arith.constant 0 : index
    %3 = vector.load %arg4[%c0_3, %c0_4] : memref<1x24xf32, #tpu.memory_space<vmem>>, vector<1x24xf32>
    %4 = arith.mulf %2, %2 : vector<24x128xf32>
    %cst_5 = arith.constant dense<0.000000e+00> : vector<1x128xf32>
    %5 = tpu.matmul %3, %4, %cst_5 {dimension_numbers = #tpu.dot_dimension_numbers<[1], [0], [0], [1], [0, 0, 1, 1], [], []>} : vector<1x24xf32>, vector<24x128xf32>, vector<1x128xf32> -> vector<1x128xf32>
    %c0_6 = arith.constant 0 : index
    %c0_7 = arith.constant 0 : index
    %6 = vector.load %arg5[%c0_6, %c0_7] : memref<1x24xf32, #tpu.memory_space<vmem>>, vector<1x24xf32>
    %cst_8 = arith.constant dense<0.000000e+00> : vector<1x128xf32>
    %7 = tpu.matmul %6, %2, %cst_8 {dimension_numbers = #tpu.dot_dimension_numbers<[1], [0], [0], [1], [0, 0, 1, 1], [], []>} : vector<1x24xf32>, vector<24x128xf32>, vector<1x128xf32> -> vector<1x128xf32>
    %c0_9 = arith.constant 0 : index
    %c0_10 = arith.constant 0 : index
    %8 = vector.load %arg3[%c0_9, %c0_10] : memref<1x32xf32, #tpu.memory_space<vmem>>, vector<1x32xf32>
    %9 = arith.mulf %0, %0 : vector<128x32xf32>
    %cst_11 = arith.constant dense<0.000000e+00> : vector<1x128xf32>
    %10 = tpu.matmul %8, %9, %cst_11 {dimension_numbers = #tpu.dot_dimension_numbers<[1], [1], [0], [0], [0, 0, 1, 0], [], []>} : vector<1x32xf32>, vector<128x32xf32>, vector<1x128xf32> -> vector<1x128xf32>
    %11 = arith.subf %5, %10 : vector<1x128xf32>
    %12 = arith.addf %11, %7 : vector<1x128xf32>
    %c0_12 = arith.constant 0 : index
    %13 = memref.load %arg6[%c0_12] : memref<1xf32, #tpu.memory_space<smem>>
    %14 = vector.broadcast %13 : f32 to vector<1x128xf32>
    %15 = arith.addf %12, %14 : vector<1x128xf32>
    %c0_13 = arith.constant 0 : index
    %c0_14 = arith.constant 0 : index
    %c0_15 = arith.constant 0 : index
    %16 = vector.load %arg7[%c0_13, %c0_14, %c0_15] : memref<1x1x128xf32, #tpu.memory_space<vmem>>, vector<1x1x128xf32>
    %17 = vector.shape_cast %16 : vector<1x1x128xf32> to vector<1x128xf32>
    %18 = vector.shape_cast %15 : vector<1x128xf32> to vector<1x1x128xf32>
    tpu.vector_store %arg7[%c0_13, %c0_14, %c0_15], %18 {strides = array<i32>} : memref<1x1x128xf32, #tpu.memory_space<vmem>>, vector<1x1x128xf32>,
    return
  }
  func.func @transform_0(%arg0: i32) -> (i32, i32) {
    %c0_i32 = arith.constant 0 : i32
    %c0_i32_0 = arith.constant 0 : i32
    return %arg0, %c0_i32 : i32, i32
  }
  func.func @transform_1(%arg0: i32) -> (i32, i32) {
    %c0_i32 = arith.constant 0 : i32
    %c0_i32_0 = arith.constant 0 : i32
    %c0_i32_1 = arith.constant 0 : i32
    return %c0_i32, %c0_i32_0 : i32, i32
  }
  func.func @transform_2(%arg0: i32) -> (i32, i32) {
    %c0_i32 = arith.constant 0 : i32
    %c0_i32_0 = arith.constant 0 : i32
    %c0_i32_1 = arith.constant 0 : i32
    return %c0_i32, %c0_i32_0 : i32, i32
  }
  func.func @transform_3(%arg0: i32) -> (i32, i32) {
    %c0_i32 = arith.constant 0 : i32
    %c0_i32_0 = arith.constant 0 : i32
    %c0_i32_1 = arith.constant 0 : i32
    return %c0_i32, %c0_i32_0 : i32, i32
  }
  func.func @transform_4(%arg0: i32) -> (i32, i32) {
    %c0_i32 = arith.constant 0 : i32
    %c0_i32_0 = arith.constant 0 : i32
    %c0_i32_1 = arith.constant 0 : i32
    return %c0_i32, %c0_i32_0 : i32, i32
  }
  func.func @transform_5(%arg0: i32) -> i32 {
    %c0_i32 = arith.constant 0 : i32
    %c0_i32_0 = arith.constant 0 : i32
    return %c0_i32 : i32
  }
  func.func @transform_6(%arg0: i32) -> (i32, i32, i32) {
    %c0_i32 = arith.constant 0 : i32
    %c0_i32_0 = arith.constant 0 : i32
    %c0_i32_1 = arith.constant 0 : i32
    return %arg0, %c0_i32, %c0_i32_0 : i32, i32, i32
  }
}

</mosaic_0001>

<llo_original>
// kernel: tpu_custom_call.1
$region0: #{tpu_custom_call.1}
  #allocation0 [shape = 'u32[]', space=smem, size = 0x4, offset = 0x4, fixed_abs, tag = 'smem constant byte address 0x4 - core index']
  #allocation1 [shape = 'u32[144,128]{1,0:T(1,128)}', space=vmem, size = 0x12000, scoped, tag = 'internal scratch']
  #allocation2 [shape = 'f32[1]{0:T(128)S(6)}', space=smem, size = 0x200, scoped, tag = 'scoped memory for tpu_custom_call.1']
  %s0 = inlined_call_operand.vmem [shape: f32[256,32], index: 0, kind: input, shape index: {}]
  %s1 = inlined_call_operand.vmem [shape: f32[24,32], index: 1, kind: input, shape index: {}]
  %s2 = inlined_call_operand.vmem [shape: f32[1,32], index: 2, kind: input, shape index: {}]
  %s3 = inlined_call_operand.vmem [shape: f32[1,24], index: 3, kind: input, shape index: {}]
  %s4 = inlined_call_operand.vmem [shape: f32[1,24], index: 4, kind: input, shape index: {}]
  %s5 = inlined_call_operand.<no memory space> [shape: f32[1], index: 5, kind: input, shape index: {}]
  %s6 = inlined_call_operand.hbm [shape: f32[2,1,128], index: 6, kind: output, shape index: {}]
  %s7 = sld [smem:[#allocation0]]
  $region57: #{tpu_custom_call.1} parent=0
    _
  %s9 = ssub.s32 1, %s7
  %s10 = scalar_select 0, %s9, %s7
  %11 = sst [smem:[#allocation2]] %s5
  $region1: #{tpu_custom_call.1} parent=0
    #allocation3 [shape = 'u8[1024]{0}', space=vmem, size = 0x400, scoped, tag = 'output window, operand 0']
    #allocation4 [shape = 's32[2]{0}', space=sflag, size = 0x8, scoped, tag = 'scoped memory for tpu_custom_call.1']
    %12 = vsyncpa [#allocation4], 0
    %s13 = scalar_lea.sflag [#allocation4], 1
    %14 = vsyncpa %s13, 0
    loop: start=0, step=1, limit=4
    $region2: #{tpu_custom_call.1} parent=1 // loop_pre_header
      _
    $region3: #{tpu_custom_call.1} parent=1 // loop_header
      %s16 = sphi 0, %s20
      %p17 = scmp.ge.s32.totalorder %s16, 4
      %s26 = sphi 0, %s28
      %s29 = sphi 0, %s26
      %s30 = sphi 0, %s29
      %s46 = sphi 0, %s30
      %s50 = sphi 0, %s50
      %s52 = sphi 0, %s50
      %s53 = sphi 0, %s52
      %s67 = sphi 0, %s53
      %s71 = sphi 0, %s71
      %s73 = sphi 0, %s71
      %s74 = sphi 0, %s73
      %s88 = sphi 0, %s74
      %s92 = sphi 0, %s92
      %s94 = sphi 0, %s92
      %s95 = sphi 0, %s94
      %s109 = sphi 0, %s95
      %s113 = sphi 0, %s113
      %s115 = sphi 0, %s113
      %s116 = sphi 0, %s115
      %s130 = sphi 0, %s116
      %s134 = sphi 0, %s134
      %s136 = sphi 0, %s134
      %s137 = sphi 0, %s136
      %s151 = sphi 0, %s137
      %s157 = sphi 0, %s159
      %s160 = sphi 0, %s157
      %s161 = sphi 0, %s160
      %s177 = sphi 0, %s161
    $region4: #{tpu_custom_call.1} parent=1 // loop_header_branch
      %19 = sbr.rel (%p17) target = $region8
    $region5: #{tpu_custom_call.1} parent=1 // loop_body
      %s21 = ssub.s32 %s16, 1
      %s22 = ssub.s32 %s16, 2
      %s23 = sadd.s32 %s16, 1
      %s24 = ssub.s32 %s16, %s23
      %p25 = scmp.eq.s32.totalorder %s24, 0
      %s27 = sadd.s32 %s26, 1
      %s28 = scalar_select %p25, %s26, %s27
      %p31 = pneg %p25
      %p32 = scmp.eq.s32.totalorder %s16, 1
      %p33 = por %p31, %p32
      %p34 = scmp.ne.s32.totalorder %s26, %s29
      %p35 = scmp.eq.s32.totalorder %s16, 0
      %p36 = por %p34, %p35
      %p37 = scmp.ne.s32.totalorder %s26, %s29
      %p38 = scmp.eq.s32.totalorder %s21, 1
      %p39 = por %p37, %p38
      %p40 = scmp.ne.s32.totalorder %s29, %s30
      %p41 = scmp.eq.s32.totalorder %s21, 0
      %p42 = por %p40, %p41
      %p43 = scmp.ne.s32.totalorder %s29, %s30
      %p44 = scmp.eq.s32.totalorder %s22, 1
      %p45 = por %p43, %p44
      %p47 = scmp.ne.s32.totalorder %s30, %s46
      %p48 = scmp.eq.s32.totalorder %s22, 0
      %p49 = por %p47, %p48
      %s51 = sadd.s32 %s50, 1
      %p54 = scmp.eq.s32.totalorder %s16, 1
      %p55 = scmp.ne.s32.totalorder %s50, %s52
      %p56 = scmp.eq.s32.totalorder %s16, 0
      %p57 = por %p55, %p56
      %p58 = scmp.ne.s32.totalorder %s50, %s52
      %p59 = scmp.eq.s32.totalorder %s21, 1
      %p60 = por %p58, %p59
      %p61 = scmp.ne.s32.totalorder %s52, %s53
      %p62 = scmp.eq.s32.totalorder %s21, 0
      %p63 = por %p61, %p62
      %p64 = scmp.ne.s32.totalorder %s52, %s53
      %p65 = scmp.eq.s32.totalorder %s22, 1
      %p66 = por %p64, %p65
      %p68 = scmp.ne.s32.totalorder %s53, %s67
      %p69 = scmp.eq.s32.totalorder %s22, 0
      %p70 = por %p68, %p69
      %s72 = sadd.s32 %s71, 1
      %p75 = scmp.eq.s32.totalorder %s16, 1
      %p76 = scmp.ne.s32.totalorder %s71, %s73
      %p77 = scmp.eq.s32.totalorder %s16, 0
      %p78 = por %p76, %p77
      %p79 = scmp.ne.s32.totalorder %s71, %s73
      %p80 = scmp.eq.s32.totalorder %s21, 1
      %p81 = por %p79, %p80
      %p82 = scmp.ne.s32.totalorder %s73, %s74
      %p83 = scmp.eq.s32.totalorder %s21, 0
      %p84 = por %p82, %p83
      %p85 = scmp.ne.s32.totalorder %s73, %s74
      %p86 = scmp.eq.s32.totalorder %s22, 1
      %p87 = por %p85, %p86
      %p89 = scmp.ne.s32.totalorder %s74, %s88
      %p90 = scmp.eq.s32.totalorder %s22, 0
      %p91 = por %p89, %p90
      %s93 = sadd.s32 %s92, 1
      %p96 = scmp.eq.s32.totalorder %s16, 1
      %p97 = scmp.ne.s32.totalorder %s92, %s94
      %p98 = scmp.eq.s32.totalorder %s16, 0
      %p99 = por %p97, %p98
      %p100 = scmp.ne.s32.totalorder %s92, %s94
      %p101 = scmp.eq.s32.totalorder %s21, 1
      %p102 = por %p100, %p101
      %p103 = scmp.ne.s32.totalorder %s94, %s95
      %p104 = scmp.eq.s32.totalorder %s21, 0
      %p105 = por %p103, %p104
      %p106 = scmp.ne.s32.totalorder %s94, %s95
      %p107 = scmp.eq.s32.totalorder %s22, 1
      %p108 = por %p106, %p107
      %p110 = scmp.ne.s32.totalorder %s95, %s109
      %p111 = scmp.eq.s32.totalorder %s22, 0
      %p112 = por %p110, %p111
      %s114 = sadd.s32 %s113, 1
      %p117 = scmp.eq.s32.totalorder %s16, 1
      %p118 = scmp.ne.s32.totalorder %s113, %s115
      %p119 = scmp.eq.s32.totalorder %s16, 0
      %p120 = por %p118, %p119
      %p121 = scmp.ne.s32.totalorder %s113, %s115
      %p122 = scmp.eq.s32.totalorder %s21, 1
      %p123 = por %p121, %p122
      %p124 = scmp.ne.s32.totalorder %s115, %s116
      %p125 = scmp.eq.s32.totalorder %s21, 0
      %p126 = por %p124, %p125
      %p127 = scmp.ne.s32.totalorder %s115, %s116
      %p128 = scmp.eq.s32.totalorder %s22, 1
      %p129 = por %p127, %p128
      %p131 = scmp.ne.s32.totalorder %s116, %s130
      %p132 = scmp.eq.s32.totalorder %s22, 0
      %p133 = por %p131, %p132
      %s135 = sadd.s32 %s134, 1
      %p138 = scmp.eq.s32.totalorder %s16, 1
      %p139 = scmp.ne.s32.totalorder %s134, %s136
      %p140 = scmp.eq.s32.totalorder %s16, 0
      %p141 = por %p139, %p140
      %p142 = scmp.ne.s32.totalorder %s134, %s136
      %p143 = scmp.eq.s32.totalorder %s21, 1
      %p144 = por %p142, %p143
      %p145 = scmp.ne.s32.totalorder %s136, %s137
      %p146 = scmp.eq.s32.totalorder %s21, 0
      %p147 = por %p145, %p146
      %p148 = scmp.ne.s32.totalorder %s136, %s137
      %p149 = scmp.eq.s32.totalorder %s22, 1
      %p150 = por %p148, %p149
      %p152 = scmp.ne.s32.totalorder %s137, %s151
      %p153 = scmp.eq.s32.totalorder %s22, 0
      %p154 = por %p152, %p153
      %s155 = ssub.s32 %s16, %s23
      %p156 = scmp.eq.s32.totalorder %s155, 0
      %s158 = sadd.s32 %s157, 1
      %s159 = scalar_select %p156, %s157, %s158
      %p162 = pneg %p156
      %p163 = scmp.eq.s32.totalorder %s16, 1
      %p164 = por %p162, %p163
      %p165 = scmp.ne.s32.totalorder %s157, %s160
      %p166 = scmp.eq.s32.totalorder %s16, 0
      %p167 = por %p165, %p166
      %p168 = scmp.ne.s32.totalorder %s157, %s160
      %p169 = scmp.eq.s32.totalorder %s21, 1
      %p170 = por %p168, %p169
      %p171 = scmp.ne.s32.totalorder %s160, %s161
      %p172 = scmp.eq.s32.totalorder %s21, 0
      %p173 = por %p171, %p172
      %p174 = scmp.ne.s32.totalorder %s160, %s161
      %p175 = scmp.eq.s32.totalorder %s22, 1
      %p176 = por %p174, %p175
      %p178 = scmp.ne.s32.totalorder %s161, %s177
      %p179 = scmp.eq.s32.totalorder %s22, 0
      %p180 = por %p178, %p179
      %p181 = scmp.le.s32.totalorder 1, %s16
      %p182 = scmp.lt.s32.totalorder %s16, 3
      %p183 = pnand %p181, %p182
      %p184 = pneg %p183
      // Predicated region
      $region9: #{tpu_custom_call.1} parent=5 // pred_check
        _
      $region10: #{tpu_custom_call.1} parent=5 // pred_check_branch
        %186 = sbr.rel (%p183) target = $region12
      $region11: #{tpu_custom_call.1} parent=5 // pred_region
        %s187 = ssub.s32 %s16, 1
        // Predicated region
        $region13: #{tpu_custom_call.1} parent=11 // pred_check
          %p188 = pneg %p63
        $region14: #{tpu_custom_call.1} parent=11 // pred_check_branch
          %190 = sbr.rel (%p188) target = $region16
        $region15: #{tpu_custom_call.1} parent=11 // pred_region
          _
        $region16: #{tpu_custom_call.1} parent=11 // pred_fallthru
          _
        // Predicated region
        $region17: #{tpu_custom_call.1} parent=11 // pred_check
          %p191 = pneg %p84
        $region18: #{tpu_custom_call.1} parent=11 // pred_check_branch
          %193 = sbr.rel (%p191) target = $region20
        $region19: #{tpu_custom_call.1} parent=11 // pred_region
          _
        $region20: #{tpu_custom_call.1} parent=11 // pred_fallthru
          _
        // Predicated region
        $region21: #{tpu_custom_call.1} parent=11 // pred_check
          %p194 = pneg %p105
        $region22: #{tpu_custom_call.1} parent=11 // pred_check_branch
          %196 = sbr.rel (%p194) target = $region24
        $region23: #{tpu_custom_call.1} parent=11 // pred_region
          _
        $region24: #{tpu_custom_call.1} parent=11 // pred_fallthru
          _
        // Predicated region
        $region25: #{tpu_custom_call.1} parent=11 // pred_check
          %p197 = pneg %p126
        $region26: #{tpu_custom_call.1} parent=11 // pred_check_branch
          %199 = sbr.rel (%p197) target = $region28
        $region27: #{tpu_custom_call.1} parent=11 // pred_region
          _
        $region28: #{tpu_custom_call.1} parent=11 // pred_fallthru
          _
        // Predicated region
        $region29: #{tpu_custom_call.1} parent=11 // pred_check
          %p200 = pneg %p147
        $region30: #{tpu_custom_call.1} parent=11 // pred_check_branch
          %202 = sbr.rel (%p200) target = $region32
        $region31: #{tpu_custom_call.1} parent=11 // pred_region
          _
        $region32: #{tpu_custom_call.1} parent=11 // pred_fallthru
          _
      $region12: #{tpu_custom_call.1} parent=5 // pred_fallthru
        _
      %p203 = scmp.lt.s32.totalorder %s16, 2
      // Predicated region
      $region33: #{tpu_custom_call.1} parent=5 // pred_check
        %p204 = pneg %p203
      $region34: #{tpu_custom_call.1} parent=5 // pred_check_branch
        %206 = sbr.rel (%p204) target = $region36
      $region35: #{tpu_custom_call.1} parent=5 // pred_region
        // Predicated region
        $region37: #{tpu_custom_call.1} parent=35 // pred_check
          %p207 = pneg %p36
        $region38: #{tpu_custom_call.1} parent=35 // pred_check_branch
          %209 = sbr.rel (%p207) target = $region40
        $region39: #{tpu_custom_call.1} parent=35 // pred_region
          %s210 = smul.u32 16, %s16
          %p211 = scmp.lt.s32.totalorder %s210, 31
          %s212 = scalar_select %p211, %s210, 31
          %s213 = smul.addr %s212, 8
          %s214 = scalar_lea.vmem %s0, %s213
          %s215 = smul.u32 16, %s16
        $region40: #{tpu_custom_call.1} parent=35 // pred_fallthru
          _
      $region36: #{tpu_custom_call.1} parent=5 // pred_fallthru
        _
      %p216 = scmp.le.s32.totalorder 1, %s16
      %p217 = scmp.lt.s32.totalorder %s16, 3
      %p218 = pnand %p216, %p217
      %p219 = pneg %p218
      // Predicated region
      $region41: #{tpu_custom_call.1} parent=5 // pred_check
        _
      $region42: #{tpu_custom_call.1} parent=5 // pred_check_branch
        %221 = sbr.rel (%p218) target = $region44
      $region43: #{tpu_custom_call.1} parent=5 // pred_region
        %s222 = ssub.s32 %s16, 1
        %s223 = smul.u32 16, %s21
        %p224 = scmp.lt.s32.totalorder %s223, 31
        %s225 = scalar_select %p224, %s223, 31
        %s226 = smul.addr %s225, 8
        %s227 = scalar_lea.vmem %s0, %s226
        %p228 = pneg %p42
        %p229 = pneg %p39
        %p230 = pneg %p63
        %p231 = pneg %p60
        %p232 = pneg %p84
        %p233 = pneg %p81
        %p234 = pneg %p105
        %p235 = pneg %p102
        %p236 = pneg %p126
        %p237 = pneg %p123
        %p238 = pneg %p147
        %p239 = pneg %p144
        %p240 = pneg %p173
        %p241 = pneg %p170
        %s242 = sand.u32 %s160, 1
        %s243 = scalar_lea.sflag [#allocation4], %s242
        %s244 = sand.u32 %s160, 1
        %s245 = scalar_lea.vmem [#allocation3], %s244
        %s246 = smul.u32 16, %s21
        %p247 = scmp.lt.s32.totalorder %s246, 31
        %s248 = scalar_select %p247, %s246, 31
        %s249 = smul.addr %s248, 8
        %s250 = scalar_lea.vmem %s0, %s249
        %s251 = smul.u32 16, %s21
        %v252 = vld [vmem:[%s250] sm:$0xff]
        %v253 = vld [vmem:[%s250 + $0x8] sm:$0xff]
        %v254 = vld [vmem:[%s250 + $0x10] sm:$0xff]
        %v255 = vld [vmem:[%s250 + $0x18] sm:$0xff]
        %v256 = vld [vmem:[%s250 + $0x20] sm:$0xff]
        %v257 = vld [vmem:[%s250 + $0x28] sm:$0xff]
        %v258 = vld [vmem:[%s250 + $0x30] sm:$0xff]
        %v259 = vld [vmem:[%s250 + $0x38] sm:$0xff]
        %v260 = vld [vmem:[%s250 + $0x40] sm:$0xff]
        %v261 = vld [vmem:[%s250 + $0x48] sm:$0xff]
        %v262 = vld [vmem:[%s250 + $0x50] sm:$0xff]
        %v263 = vld [vmem:[%s250 + $0x58] sm:$0xff]
        %v264 = vld [vmem:[%s250 + $0x60] sm:$0xff]
        %v265 = vld [vmem:[%s250 + $0x68] sm:$0xff]
        %v266 = vld [vmem:[%s250 + $0x70] sm:$0xff]
        %v267 = vld [vmem:[%s250 + $0x78] sm:$0xff]
        %v268 = vld [vmem:[%s1] sm:$0xff]
        %v269 = vld [vmem:[%s1 + $0x8] sm:$0xff]
        %v270 = vld [vmem:[%s1 + $0x10] sm:$0xff]
        %vm271 = vcmask 261120
        %v273 = vsel %vm271, %v268, 0
        %v276 = vsel %vm271, %v269, 0
        %v279 = vsel %vm271, %v270, 0
        %v282 = vsel %vm271, %v252, 0
        %v285 = vsel %vm271, %v253, 0
        %v288 = vsel %vm271, %v254, 0
        %v291 = vsel %vm271, %v255, 0
        %v294 = vsel %vm271, %v256, 0
        %v297 = vsel %vm271, %v257, 0
        %v300 = vsel %vm271, %v258, 0
        %v303 = vsel %vm271, %v259, 0
        %v306 = vsel %vm271, %v260, 0
        %v309 = vsel %vm271, %v261, 0
        %v312 = vsel %vm271, %v262, 0
        %v315 = vsel %vm271, %v263, 0
        %v318 = vsel %vm271, %v264, 0
        %v321 = vsel %vm271, %v265, 0
        %v324 = vsel %vm271, %v266, 0
        %v327 = vsel %vm271, %v267, 0
        %329 = vmatprep.subr.mxu0 0.0
        %330 = vmatpush1.xpose.msra.mxu0 %v327
        %331 = vmatprep.subr.mxu0 0.0
        %332 = vmatpush1.xpose.msra.mxu0 %v324
        %333 = vmatprep.subr.mxu0 0.0
        %334 = vmatpush1.xpose.msra.mxu0 %v321
        %335 = vmatprep.subr.mxu0 0.0
        %336 = vmatpush1.xpose.msra.mxu0 %v318
        %337 = vmatprep.subr.mxu0 0.0
        %338 = vmatpush1.xpose.msra.mxu0 %v315
        %339 = vmatprep.subr.mxu0 0.0
        %340 = vmatpush1.xpose.msra.mxu0 %v312
        %341 = vmatprep.subr.mxu0 0.0
        %342 = vmatpush1.xpose.msra.mxu0 %v309
        %343 = vmatprep.subr.mxu0 0.0
        %344 = vmatpush1.xpose.msra.mxu0 %v306
        %345 = vmatprep.subr.mxu0 0.0
        %346 = vmatpush1.xpose.msra.mxu0 %v303
        %347 = vmatprep.subr.mxu0 0.0
        %348 = vmatpush1.xpose.msra.mxu0 %v300
        %349 = vmatprep.subr.mxu0 0.0
        %350 = vmatpush1.xpose.msra.mxu0 %v297
        %351 = vmatprep.subr.mxu0 0.0
        %352 = vmatpush1.xpose.msra.mxu0 %v294
        %353 = vmatprep.subr.mxu0 0.0
        %354 = vmatpush1.xpose.msra.mxu0 %v291
        %355 = vmatprep.subr.mxu0 0.0
        %356 = vmatpush1.xpose.msra.mxu0 %v288
        %357 = vmatprep.subr.mxu0 0.0
        %358 = vmatpush1.xpose.msra.mxu0 %v285
        %359 = vmatprep.subr.mxu0 0.0
        %360 = vmatpush1.xpose.msra.mxu0 %v282
        %361 = vmatprep.subr.mxu0 0.0
        %362 = vmatpush2.xpose.msra.mxu0 0.0
        %363 = vmatprep.subr.mxu0 0.0
        %364 = vmatpush2.xpose.msra.mxu0 0.0
        %365 = vmatprep.subr.mxu0 0.0
        %366 = vmatpush2.xpose.msra.mxu0 0.0
        %367 = vmatprep.subr.mxu0 0.0
        %368 = vmatpush2.xpose.msra.mxu0 0.0
        %369 = vmatprep.subr.mxu0 0.0
        %370 = vmatpush2.xpose.msra.mxu0 0.0
        %371 = vmatprep.subr.mxu0 0.0
        %372 = vmatpush2.xpose.msra.mxu0 0.0
        %373 = vmatprep.subr.mxu0 0.0
        %374 = vmatpush2.xpose.msra.mxu0 0.0
        %375 = vmatprep.subr.mxu0 0.0
        %376 = vmatpush2.xpose.msra.mxu0 0.0
        %377 = vmatprep.subr.mxu0 0.0
        %378 = vmatpush2.xpose.msra.mxu0 0.0
        %379 = vmatprep.subr.mxu0 0.0
        %380 = vmatpush2.xpose.msra.mxu0 0.0
        %381 = vmatprep.subr.mxu0 0.0
        %382 = vmatpush2.xpose.msra.mxu0 0.0
        %383 = vmatprep.subr.mxu0 0.0
        %384 = vmatpush2.xpose.msra.mxu0 0.0
        %385 = vmatprep.subr.mxu0 0.0
        %386 = vmatpush2.xpose.msra.mxu0 0.0
        %387 = vmatprep.subr.mxu0 0.0
        %388 = vmatpush2.xpose.msra.mxu0 0.0
        %389 = vmatprep.subr.mxu0 0.0
        %390 = vmatpush2.xpose.msra.mxu0 0.0
        %391 = vmatprep.subr.mxu0 0.0
        %392 = vmatpush2.xpose.msra.mxu0 0.0
        %393 = vmatprep.mubr.f32.mxu0 0.0
        %394 = vmatmul.mubr.f32.gmra.mxu0 %v273
        %v395 = vpop.f32.mrf.mxu0
        %v396 = vadd.f32 0.0, %v395
        %v397 = vpop.f32.mrf.mxu0
        %398 = vmatprep.mubr.f32.mxu0 0.0
        %399 = vmatmul.mubr.f32.gmra.mxu0 %v276
        %v400 = vpop.f32.mrf.mxu0
        %v401 = vadd.f32 0.0, %v400
        %v402 = vpop.f32.mrf.mxu0
        %403 = vmatprep.mubr.f32.mxu0 0.0
        %404 = vmatmul.mubr.f32.gmra.mxu0 %v279
        %v405 = vpop.f32.mrf.mxu0
        %v406 = vadd.f32 0.0, %v405
        %v407 = vpop.f32.mrf.mxu0
        %408 = vdwg.mxu0
        %v409 = vld [vmem:[%s3] sm:$0x1]
        %v410 = vmul.f32 %v396, %v396
        %v411 = vmul.f32 %v401, %v401
        %v412 = vmul.f32 %v406, %v406
        %vm413 = vcmask 195584
        %v415 = vsel %vm413, %v409, 0
        %417 = vmatprep.subr.mxu0 0.0
        %418 = vmatpush1.msra.mxu0 0.0
        %419 = vmatprep.subr.mxu0 0.0
        %420 = vmatpush1.msra.mxu0 0.0
        %421 = vmatprep.subr.mxu0 0.0
        %422 = vmatpush1.msra.mxu0 0.0
        %423 = vmatprep.subr.mxu0 0.0
        %424 = vmatpush1.msra.mxu0 0.0
        %425 = vmatprep.subr.mxu0 0.0
        %426 = vmatpush1.msra.mxu0 0.0
        %427 = vmatprep.subr.mxu0 0.0
        %428 = vmatpush1.msra.mxu0 0.0
        %429 = vmatprep.subr.mxu0 0.0
        %430 = vmatpush1.msra.mxu0 0.0
        %431 = vmatprep.subr.mxu0 0.0
        %432 = vmatpush1.msra.mxu0 0.0
        %433 = vmatprep.subr.mxu0 0.0
        %434 = vmatpush1.msra.mxu0 0.0
        %435 = vmatprep.subr.mxu0 0.0
        %436 = vmatpush1.msra.mxu0 0.0
        %437 = vmatprep.subr.mxu0 0.0
        %438 = vmatpush1.msra.mxu0 0.0
        %439 = vmatprep.subr.mxu0 0.0
        %440 = vmatpush1.msra.mxu0 0.0
        %441 = vmatprep.subr.mxu0 0.0
        %442 = vmatpush1.msra.mxu0 0.0
        %443 = vmatprep.subr.mxu0 0.0
        %444 = vmatpush1.msra.mxu0 %v412
        %445 = vmatprep.subr.mxu0 0.0
        %446 = vmatpush1.msra.mxu0 %v411
        %447 = vmatprep.subr.mxu0 0.0
        %448 = vmatpush1.msra.mxu0 %v410
        %449 = vmatprep.subr.mxu0 0.0
        %450 = vmatpush2.msra.mxu0 0.0
        %451 = vmatprep.subr.mxu0 0.0
        %452 = vmatpush2.msra.mxu0 0.0
        %453 = vmatprep.subr.mxu0 0.0
        %454 = vmatpush2.msra.mxu0 0.0
        %455 = vmatprep.subr.mxu0 0.0
        %456 = vmatpush2.msra.mxu0 0.0
        %457 = vmatprep.subr.mxu0 0.0
        %458 = vmatpush2.msra.mxu0 0.0
        %459 = vmatprep.subr.mxu0 0.0
        %460 = vmatpush2.msra.mxu0 0.0
        %461 = vmatprep.subr.mxu0 0.0
        %462 = vmatpush2.msra.mxu0 0.0
        %463 = vmatprep.subr.mxu0 0.0
        %464 = vmatpush2.msra.mxu0 0.0
        %465 = vmatprep.subr.mxu0 0.0
        %466 = vmatpush2.msra.mxu0 0.0
        %467 = vmatprep.subr.mxu0 0.0
        %468 = vmatpush2.msra.mxu0 0.0
        %469 = vmatprep.subr.mxu0 0.0
        %470 = vmatpush2.msra.mxu0 0.0
        %471 = vmatprep.subr.mxu0 0.0
        %472 = vmatpush2.msra.mxu0 0.0
        %473 = vmatprep.subr.mxu0 0.0
        %474 = vmatpush2.msra.mxu0 0.0
        %475 = vmatprep.subr.mxu0 0.0
        %476 = vmatpush2.msra.mxu0 0.0
        %477 = vmatprep.subr.mxu0 0.0
        %478 = vmatpush2.msra.mxu0 0.0
        %479 = vmatprep.subr.mxu0 0.0
        %480 = vmatpush2.msra.mxu0 0.0
        %481 = vmatprep.mubr.f32.mxu0 0.0
        %482 = vmatmul.mubr.f32.gmra.mxu0 %v415
        %v483 = vpop.f32.mrf.mxu0
        %v484 = vadd.f32 0.0, %v483
        %v485 = vpop.f32.mrf.mxu0
        %486 = vdwg.mxu0
        %v487 = vld [vmem:[%s4] sm:$0x1]
        %v489 = vsel %vm413, %v487, 0
        %491 = vmatprep.subr.mxu0 0.0
        %492 = vmatpush1.msra.mxu0 0.0
        %493 = vmatprep.subr.mxu0 0.0
        %494 = vmatpush1.msra.mxu0 0.0
        %495 = vmatprep.subr.mxu0 0.0
        %496 = vmatpush1.msra.mxu0 0.0
        %497 = vmatprep.subr.mxu0 0.0
        %498 = vmatpush1.msra.mxu0 0.0
        %499 = vmatprep.subr.mxu0 0.0
        %500 = vmatpush1.msra.mxu0 0.0
        %501 = vmatprep.subr.mxu0 0.0
        %502 = vmatpush1.msra.mxu0 0.0
        %503 = vmatprep.subr.mxu0 0.0
        %504 = vmatpush1.msra.mxu0 0.0
        %505 = vmatprep.subr.mxu0 0.0
        %506 = vmatpush1.msra.mxu0 0.0
        %507 = vmatprep.subr.mxu0 0.0
        %508 = vmatpush1.msra.mxu0 0.0
        %509 = vmatprep.subr.mxu0 0.0
        %510 = vmatpush1.msra.mxu0 0.0
        %511 = vmatprep.subr.mxu0 0.0
        %512 = vmatpush1.msra.mxu0 0.0
        %513 = vmatprep.subr.mxu0 0.0
        %514 = vmatpush1.msra.mxu0 0.0
        %515 = vmatprep.subr.mxu0 0.0
        %516 = vmatpush1.msra.mxu0 0.0
        %517 = vmatprep.subr.mxu0 0.0
        %518 = vmatpush1.msra.mxu0 %v406
        %519 = vmatprep.subr.mxu0 0.0
        %520 = vmatpush1.msra.mxu0 %v401
        %521 = vmatprep.subr.mxu0 0.0
        %522 = vmatpush1.msra.mxu0 %v396
        %523 = vmatprep.subr.mxu0 0.0
        %524 = vmatpush2.msra.mxu0 0.0
        %525 = vmatprep.subr.mxu0 0.0
        %526 = vmatpush2.msra.mxu0 0.0
        %527 = vmatprep.subr.mxu0 0.0
        %528 = vmatpush2.msra.mxu0 0.0
        %529 = vmatprep.subr.mxu0 0.0
        %530 = vmatpush2.msra.mxu0 0.0
        %531 = vmatprep.subr.mxu0 0.0
        %532 = vmatpush2.msra.mxu0 0.0
        %533 = vmatprep.subr.mxu0 0.0
        %534 = vmatpush2.msra.mxu0 0.0
        %535 = vmatprep.subr.mxu0 0.0
        %536 = vmatpush2.msra.mxu0 0.0
        %537 = vmatprep.subr.mxu0 0.0
        %538 = vmatpush2.msra.mxu0 0.0
        %539 = vmatprep.subr.mxu0 0.0
        %540 = vmatpush2.msra.mxu0 0.0
        %541 = vmatprep.subr.mxu0 0.0
        %542 = vmatpush2.msra.mxu0 0.0
        %543 = vmatprep.subr.mxu0 0.0
        %544 = vmatpush2.msra.mxu0 0.0
        %545 = vmatprep.subr.mxu0 0.0
        %546 = vmatpush2.msra.mxu0 0.0
        %547 = vmatprep.subr.mxu0 0.0
        %548 = vmatpush2.msra.mxu0 0.0
        %549 = vmatprep.subr.mxu0 0.0
        %550 = vmatpush2.msra.mxu0 0.0
        %551 = vmatprep.subr.mxu0 0.0
        %552 = vmatpush2.msra.mxu0 0.0
        %553 = vmatprep.subr.mxu0 0.0
        %554 = vmatpush2.msra.mxu0 0.0
        %555 = vmatprep.mubr.f32.mxu0 0.0
        %556 = vmatmul.mubr.f32.gmra.mxu0 %v489
        %v557 = vpop.f32.mrf.mxu0
        %v558 = vadd.f32 0.0, %v557
        %v559 = vpop.f32.mrf.mxu0
        %560 = vdwg.mxu0
        %v561 = vld [vmem:[%s2] sm:$0x1]
        %v562 = vmul.f32 %v252, %v252
        %v563 = vmul.f32 %v253, %v253
        %v564 = vmul.f32 %v254, %v254
        %v565 = vmul.f32 %v255, %v255
        %v566 = vmul.f32 %v256, %v256
        %v567 = vmul.f32 %v257, %v257
        %v568 = vmul.f32 %v258, %v258
        %v569 = vmul.f32 %v259, %v259
        %v570 = vmul.f32 %v260, %v260
        %v571 = vmul.f32 %v261, %v261
        %v572 = vmul.f32 %v262, %v262
        %v573 = vmul.f32 %v263, %v263
        %v574 = vmul.f32 %v264, %v264
        %v575 = vmul.f32 %v265, %v265
        %v576 = vmul.f32 %v266, %v266
        %v577 = vmul.f32 %v267, %v267
        %v579 = vsel %vm271, %v561, 0
        %v582 = vsel %vm271, %v562, 0
        %v585 = vsel %vm271, %v563, 0
        %v588 = vsel %vm271, %v564, 0
        %v591 = vsel %vm271, %v565, 0
        %v594 = vsel %vm271, %v566, 0
        %v597 = vsel %vm271, %v567, 0
        %v600 = vsel %vm271, %v568, 0
        %v603 = vsel %vm271, %v569, 0
        %v606 = vsel %vm271, %v570, 0
        %v609 = vsel %vm271, %v571, 0
        %v612 = vsel %vm271, %v572, 0
        %v615 = vsel %vm271, %v573, 0
        %v618 = vsel %vm271, %v574, 0
        %v621 = vsel %vm271, %v575, 0
        %v624 = vsel %vm271, %v576, 0
        %v627 = vsel %vm271, %v577, 0
        %629 = vmatprep.subr.mxu0 0.0
        %630 = vmatpush1.xpose.msra.mxu0 %v627
        %631 = vmatprep.subr.mxu0 0.0
        %632 = vmatpush1.xpose.msra.mxu0 %v624
        %633 = vmatprep.subr.mxu0 0.0
        %634 = vmatpush1.xpose.msra.mxu0 %v621
        %635 = vmatprep.subr.mxu0 0.0
        %636 = vmatpush1.xpose.msra.mxu0 %v618
        %637 = vmatprep.subr.mxu0 0.0
        %638 = vmatpush1.xpose.msra.mxu0 %v615
        %639 = vmatprep.subr.mxu0 0.0
        %640 = vmatpush1.xpose.msra.mxu0 %v612
        %641 = vmatprep.subr.mxu0 0.0
        %642 = vmatpush1.xpose.msra.mxu0 %v609
        %643 = vmatprep.subr.mxu0 0.0
        %644 = vmatpush1.xpose.msra.mxu0 %v606
        %645 = vmatprep.subr.mxu0 0.0
        %646 = vmatpush1.xpose.msra.mxu0 %v603
        %647 = vmatprep.subr.mxu0 0.0
        %648 = vmatpush1.xpose.msra.mxu0 %v600
        %649 = vmatprep.subr.mxu0 0.0
        %650 = vmatpush1.xpose.msra.mxu0 %v597
        %651 = vmatprep.subr.mxu0 0.0
        %652 = vmatpush1.xpose.msra.mxu0 %v594
        %653 = vmatprep.subr.mxu0 0.0
        %654 = vmatpush1.xpose.msra.mxu0 %v591
        %655 = vmatprep.subr.mxu0 0.0
        %656 = vmatpush1.xpose.msra.mxu0 %v588
        %657 = vmatprep.subr.mxu0 0.0
        %658 = vmatpush1.xpose.msra.mxu0 %v585
        %659 = vmatprep.subr.mxu0 0.0
        %660 = vmatpush1.xpose.msra.mxu0 %v582
        %661 = vmatprep.subr.mxu0 0.0
        %662 = vmatpush2.xpose.msra.mxu0 0.0
        %663 = vmatprep.subr.mxu0 0.0
        %664 = vmatpush2.xpose.msra.mxu0 0.0
        %665 = vmatprep.subr.mxu0 0.0
        %666 = vmatpush2.xpose.msra.mxu0 0.0
        %667 = vmatprep.subr.mxu0 0.0
        %668 = vmatpush2.xpose.msra.mxu0 0.0
        %669 = vmatprep.subr.mxu0 0.0
        %670 = vmatpush2.xpose.msra.mxu0 0.0
        %671 = vmatprep.subr.mxu0 0.0
        %672 = vmatpush2.xpose.msra.mxu0 0.0
        %673 = vmatprep.subr.mxu0 0.0
        %674 = vmatpush2.xpose.msra.mxu0 0.0
        %675 = vmatprep.subr.mxu0 0.0
        %676 = vmatpush2.xpose.msra.mxu0 0.0
        %677 = vmatprep.subr.mxu0 0.0
        %678 = vmatpush2.xpose.msra.mxu0 0.0
        %679 = vmatprep.subr.mxu0 0.0
        %680 = vmatpush2.xpose.msra.mxu0 0.0
        %681 = vmatprep.subr.mxu0 0.0
        %682 = vmatpush2.xpose.msra.mxu0 0.0
        %683 = vmatprep.subr.mxu0 0.0
        %684 = vmatpush2.xpose.msra.mxu0 0.0
        %685 = vmatprep.subr.mxu0 0.0
        %686 = vmatpush2.xpose.msra.mxu0 0.0
        %687 = vmatprep.subr.mxu0 0.0
        %688 = vmatpush2.xpose.msra.mxu0 0.0
        %689 = vmatprep.subr.mxu0 0.0
        %690 = vmatpush2.xpose.msra.mxu0 0.0
        %691 = vmatprep.subr.mxu0 0.0
        %692 = vmatpush2.xpose.msra.mxu0 0.0
        %693 = vmatprep.mubr.f32.mxu0 0.0
        %694 = vmatmul.mubr.f32.gmra.mxu0 %v579
        %v695 = vpop.f32.mrf.mxu0
        %v696 = vadd.f32 0.0, %v695
        %v697 = vpop.f32.mrf.mxu0
        %698 = vdwg.mxu0
        %v699 = vsub.f32 %v484, %v696
        %v700 = vadd.f32 %v699, %v558
        %s701 = sld [smem:[#allocation2]]
        %v702 = vstv %s701
        %v703 = vadd.f32 %v700, %v702
        %704 = vst [vmem:[%s245] sm:$0x1] %v703
        %s705 = sand.u32 %s160, 1
        %s706 = scalar_lea.sflag [#allocation4], %s705
        %s707 = sand.u32 %s160, 1
        %s708 = scalar_lea.vmem [#allocation3], %s707
        // Predicated region
        $region45: #{tpu_custom_call.1} parent=43 // pred_check
          %p709 = pneg %p170
        $region46: #{tpu_custom_call.1} parent=43 // pred_check_branch
          %711 = sbr.rel (%p709) target = $region48
        $region47: #{tpu_custom_call.1} parent=43 // pred_region
          %s713 = ssub.s32 16, 16
          %714 = vsyncadd %s706, %s713
          %s715 = smul.addr %s21, 16
          %s716 = scalar_lea.hbm %s6, %s715
          %s718 = sshll.u32 %s708, 4
          %s719 = int_to_ptr.vmem [resolvable:$true] %s718
          %721 = dma.vmem_to_hbm [thread:$0]  %s719, 16, %s716, %s706
        $region48: #{tpu_custom_call.1} parent=43 // pred_fallthru
          _
      $region44: #{tpu_custom_call.1} parent=5 // pred_fallthru
        _
      %p722 = scmp.le.s32.totalorder 2, %s16
      // Predicated region
      $region49: #{tpu_custom_call.1} parent=5 // pred_check
        %p723 = pneg %p722
      $region50: #{tpu_custom_call.1} parent=5 // pred_check_branch
        %725 = sbr.rel (%p723) target = $region52
      $region51: #{tpu_custom_call.1} parent=5 // pred_region
        %s726 = ssub.s32 %s16, 2
        // Predicated region
        $region53: #{tpu_custom_call.1} parent=51 // pred_check
          %p727 = pneg %p176
        $region54: #{tpu_custom_call.1} parent=51 // pred_check_branch
          %729 = sbr.rel (%p727) target = $region56
        $region55: #{tpu_custom_call.1} parent=51 // pred_region
          %s730 = sand.u32 %s161, 1
          %s731 = scalar_lea.sflag [#allocation4], %s730
          %s732 = sand.u32 %s161, 1
          %s733 = scalar_lea.vmem [#allocation3], %s732
          %734 = dma.done %s731, 16
        $region56: #{tpu_custom_call.1} parent=51 // pred_fallthru
          _
      $region52: #{tpu_custom_call.1} parent=5 // pred_fallthru
        _
    $region6: #{tpu_custom_call.1} parent=1 // loop_footer
      %s20 = sadd.s32 1, %s16
    $region7: #{tpu_custom_call.1} parent=1 // loop_footer_branch
      %15 = sbr.rel target = $region3
    $region8: #{tpu_custom_call.1} parent=1 // loop_exit
      _
    %735 = vsyncpa [#allocation4], 1
    %s736 = scalar_lea.sflag [#allocation4], 1
    %737 = vsyncpa %s736, 1

</llo_original>
